<compile_context>
chip_gen: v7x
topology: tpu7x:2x2x1
jax: 0.10.0
libtpu: 0.0.40
codegen_flags: <defaults>
</compile_context>

<pallas_src>
from typing import NamedTuple

import jax
import jax.numpy as jnp
from jax.experimental import pallas as pl
from jax.experimental.pallas import tpu as pltpu

_MIB = 1024 * 1024
_NEG_INF = -1e30


def _round_up(v, m):
    return ((v + m - 1) // m) * m


def _tpu_target_info():
    """Returns (physical VMEM bytes per core, has 2 TensorCores per chip)."""
    kind = ""
    try:
        kind = jax.devices()[0].device_kind.lower()
    except Exception:
        pass
    two_tc = "v7" in kind
    vmem = None
    try:
        info = pltpu.get_tpu_info()
        for name in ("vmem_capacity_bytes", "vmem_size_bytes", "vmem_bytes"):
            v = getattr(info, name, None)
            if v:
                vmem = int(v)
                break
    except Exception:
        vmem = None
    if vmem is None:
        vmem = 64 * _MIB if two_tc else 128 * _MIB
    return vmem, two_tc


def _feature_attn_kernel(x_ref, w1_ref, b1_ref, wa_ref, ba_ref,
                         w2_ref, b2_ref, o_ref):
    # MXU: bf16 operands (dtype of the weight refs), f32 accumulation.
    mxu_dtype = w1_ref.dtype
    x = x_ref[...].astype(mxu_dtype)

    # linear1 + ReLU.  The activation is cast to bf16 once and reused for both
    # the Wa matmul and the gating multiply (fewer f32 live intermediates).
    h32 = jnp.dot(x, w1_ref[...], preferred_element_type=jnp.float32) + b1_ref[...]
    h = jnp.maximum(h32, 0.0).astype(mxu_dtype)

    # feature_attention + softmax along the (padded) feature axis.  Padded
    # lanes are masked through ba (padded entries are -1e30), so exp underflows
    # to exactly 0 there -- no in-kernel iota/where needed.
    s = jnp.dot(h, wa_ref[...], preferred_element_type=jnp.float32) + ba_ref[...]
    s = s - jnp.max(s, axis=-1, keepdims=True)
    e = jnp.exp(s)
    attn = e * pl.reciprocal(jnp.sum(e, axis=-1, keepdims=True), approx=True)

    # gate (dropout == identity in eval mode), linear2
    g = h * attn.astype(mxu_dtype)
    y = jnp.dot(g, w2_ref[...], preferred_element_type=jnp.float32) + b2_ref[...]
    o_ref[...] = y.astype(o_ref.dtype)


class PackedParams(NamedTuple):
    w1: jax.Array          # (dim_pad, hidden_pad) mxu dtype
    b1: jax.Array          # (1, hidden_pad) f32
    wa: jax.Array          # (hidden_pad, hidden_pad) mxu dtype
    ba: jax.Array          # (1, hidden_pad) f32, padded lanes = -1e30
    w2: jax.Array          # (hidden_pad, n_exp_pad) mxu dtype
    b2: jax.Array          # (1, n_exp_pad) f32
    dim: int
    dim_pad: int
    hidden_pad: int
    n_exp: int
    n_exp_pad: int


def prepack_params(params, *, use_bf16_matmul=True):
    """Pad + cast weights once (at init time) so forward calls pay no extra
    HBM pad/convert traffic."""
    w1, b1, wa, ba, w2, b2 = params
    dim, hidden = w1.shape
    n_exp = w2.shape[1]

    dim_pad = _round_up(max(dim, 128), 128)
    hidden_pad = _round_up(max(hidden, 128), 128)
    n_exp_pad = _round_up(max(n_exp, 128), 128)
    w_dtype = jnp.bfloat16 if use_bf16_matmul else jnp.float32

    w1p = jnp.pad(w1, ((0, dim_pad - dim), (0, hidden_pad - hidden))).astype(w_dtype)
    wap = jnp.pad(wa, ((0, hidden_pad - hidden), (0, hidden_pad - hidden))).astype(w_dtype)
    w2p = jnp.pad(w2, ((0, hidden_pad - hidden), (0, n_exp_pad - n_exp))).astype(w_dtype)

    b1p = jnp.pad(b1.astype(jnp.float32),
                  (0, hidden_pad - hidden)).reshape(1, hidden_pad)
    # Fold the softmax padding mask into the attention bias: padded lanes get a
    # large negative value (Wa's padded columns are zero, so the padded lanes
    # of the logits equal exactly these entries).
    bap = jnp.pad(ba.astype(jnp.float32), (0, hidden_pad - hidden),
                  constant_values=_NEG_INF).reshape(1, hidden_pad)
    b2p = jnp.pad(b2.astype(jnp.float32),
                  (0, n_exp_pad - n_exp)).reshape(1, n_exp_pad)

    return PackedParams(w1p, b1p, wap, bap, w2p, b2p,
                        dim, dim_pad, hidden_pad, n_exp, n_exp_pad)


def feature_level_attention(x, params, *, tile_m=None, use_bf16_matmul=True,
                            vmem_limit_bytes=None):
    """x: (..., dim) float32 or bfloat16. Returns (..., num_experts) in x.dtype."""
    if not isinstance(params, PackedParams):
        # Prefer calling prepack_params() once at init; this path re-packs on
        # every forward.
        params = prepack_params(params, use_bf16_matmul=use_bf16_matmul)
    p = params

    lead = x.shape[:-1]
    assert x.shape[-1] == p.dim, (x.shape, p.dim)
    xm = x.reshape(-1, p.dim)
    m = xm.shape[0]

    vmem_phys, two_tc = _tpu_target_info()
    if vmem_limit_bytes is None:
        # 48 MiB on v7x (64 MiB physical), 96 MiB on v5e/v6e (128 MiB physical).
        vmem_limit_bytes = (vmem_phys * 3) // 4
    if tile_m is None:
        tile_m = 256 if vmem_phys <= 64 * _MIB else 512

    # Row tiling: large M tiles feed the MXU a wide LHS and amortize the
    # ~600-cycle per-grid-step overhead.
    tile_m = max(8, min(_round_up(tile_m, 8), _round_up(m, 8)))
    if two_tc and m >= 16:
        # Keep >= 2 grid steps so the "parallel" M axis can be sharded across
        # both v7x TensorCores.
        tile_m = min(tile_m, _round_up((m + 1) // 2, 8))
    m_pad = _round_up(m, tile_m)

    # Lane-align rows (multiple of tile_m) and the contraction dim (multiple of
    # 128).  Zero padding is exact: W1's padded rows are zero.
    pad_rows = m_pad - m
    pad_cols = p.dim_pad - p.dim
    if pad_rows or pad_cols:
        xm = jnp.pad(xm, ((0, pad_rows), (0, pad_cols)))

    grid = (m_pad // tile_m,)

    def _call(single_buffer_weights):
        # Grid-invariant weights/biases: single-buffer them (double buffering
        # buys nothing for a constant index_map and doubles resident VMEM).
        w_mode = ({"pipeline_mode": pl.Buffered(1)}
                  if single_buffer_weights else {})
        in_specs = [
            pl.BlockSpec((tile_m, p.dim_pad), lambda i: (i, 0)),                     # x rows
            pl.BlockSpec((p.dim_pad, p.hidden_pad), lambda i: (0, 0), **w_mode),     # W1
            pl.BlockSpec((1, p.hidden_pad), lambda i: (0, 0), **w_mode),             # b1
            pl.BlockSpec((p.hidden_pad, p.hidden_pad), lambda i: (0, 0), **w_mode),  # Wa
            pl.BlockSpec((1, p.hidden_pad), lambda i: (0, 0), **w_mode),             # ba (masked)
            pl.BlockSpec((p.hidden_pad, p.n_exp_pad), lambda i: (0, 0), **w_mode),   # W2
            pl.BlockSpec((1, p.n_exp_pad), lambda i: (0, 0), **w_mode),              # b2
        ]
        return pl.pallas_call(
            _feature_attn_kernel,
            out_shape=jax.ShapeDtypeStruct((m_pad, p.n_exp_pad), jnp.float32),
            grid_spec=pltpu.PrefetchScalarGridSpec(
                num_scalar_prefetch=0,
                grid=grid,
                in_specs=in_specs,
                out_specs=pl.BlockSpec((tile_m, p.n_exp_pad), lambda i: (i, 0)),
            ),
            compiler_params=pltpu.CompilerParams(
                dimension_semantics=("parallel",),
                vmem_limit_bytes=int(vmem_limit_bytes),
            ),
        )(xm, p.w1, p.b1, p.wa, p.ba, p.w2, p.b2)

    try:
        out = _call(True)
    except Exception:
        # Fallback for jax builds without single-buffered BlockSpec support.
        out = _call(False)

    return out[:m, :p.n_exp].reshape(*lead, p.n_exp).astype(x.dtype)


def init_params(key, dim, num_experts=4):
    """Deterministic synthetic params matching the PyTorch module shapes.
    Weights stored pre-transposed: (in_features, out_features)."""
    hidden = int(dim * 0.5)
    k1, k2, k3, k4, k5, k6 = jax.random.split(key, 6)
    w1 = jax.random.normal(k1, (dim, hidden), jnp.float32) * 0.05
    b1 = jax.random.normal(k2, (hidden,), jnp.float32) * 0.01
    wa = jax.random.normal(k3, (hidden, hidden), jnp.float32) * 0.05
    ba = jax.random.normal(k4, (hidden,), jnp.float32) * 0.01
    w2 = jax.random.normal(k5, (hidden, num_experts), jnp.float32) * 0.05
    b2 = jax.random.normal(k6, (num_experts,), jnp.float32) * 0.01
    return (w1, b1, wa, ba, w2, b2)


def _reference(x, params):
    w1, b1, wa, ba, w2, b2 = params
    h = jax.nn.relu(x @ w1 + b1)
    attn = jax.nn.softmax(h @ wa + ba, axis=-1)
    h = h * attn
    return h @ w2 + b2


if __name__ == "__main__":
    key = jax.random.PRNGKey(0)
    k_x, k_p = jax.random.split(key)

    batch, seq, dim, num_experts = 2, 8, 32, 4
    x = jax.random.normal(k_x, (batch, seq, dim), jnp.float32)
    params = init_params(k_p, dim, num_experts)

    # Prepack once (pad + bf16 cast hoisted out of the forward pass).
    packed = prepack_params(params)

    out = feature_level_attention(x, packed)
    out = jax.block_until_ready(out)

    ref = _reference(x, params)
    assert out.shape == (batch, seq, num_experts), out.shape
    # bf16 MXU operands + bf16 gate + approx reciprocal -> relaxed tolerance.
    max_err = float(jnp.max(jnp.abs(out - ref)))
    assert jnp.allclose(out, ref, atol=2e-3, rtol=2e-2), max_err

    print("KERNEL_OK")
</pallas_src>

<mosaic_0001>
module attributes {stable_mosaic.version = 11 : i64} {
  func.func @_feature_attn_kernel(%arg0: i32, %arg1: memref<16x128xf32, #tpu.memory_space<vmem>>, %arg2: memref<128x128xbf16, #tpu.memory_space<vmem>>, %arg3: memref<1x128xf32, #tpu.memory_space<vmem>>, %arg4: memref<128x128xbf16, #tpu.memory_space<vmem>>, %arg5: memref<1x128xf32, #tpu.memory_space<vmem>>, %arg6: memref<128x128xbf16, #tpu.memory_space<vmem>>, %arg7: memref<1x128xf32, #tpu.memory_space<vmem>>, %arg8: memref<16x128xf32, #tpu.memory_space<vmem>>) attributes {dimension_semantics = [#tpu.dimension_semantics<parallel>], iteration_bounds = array<i64: 1>, scalar_prefetch = 0 : i64, scratch_operands = 0 : i64, tpu.core_type = #tpu.core_type<tc>, window_params = [{transform_indices = @transform_0, window_bounds = array<i64: 16, 128>}, {pipeline_mode = #tpu.pipeline_mode<synchronous>, transform_indices = @transform_1, window_bounds = array<i64: 128, 128>}, {pipeline_mode = #tpu.pipeline_mode<synchronous>, transform_indices = @transform_2, window_bounds = array<i64: 1, 128>}, {pipeline_mode = #tpu.pipeline_mode<synchronous>, transform_indices = @transform_3, window_bounds = array<i64: 128, 128>}, {pipeline_mode = #tpu.pipeline_mode<synchronous>, transform_indices = @transform_4, window_bounds = array<i64: 1, 128>}, {pipeline_mode = #tpu.pipeline_mode<synchronous>, transform_indices = @transform_5, window_bounds = array<i64: 128, 128>}, {pipeline_mode = #tpu.pipeline_mode<synchronous>, transform_indices = @transform_6, window_bounds = array<i64: 1, 128>}, {transform_indices = @transform_7, window_bounds = array<i64: 16, 128>}]} {
    %c0 = arith.constant 0 : index
    %c0_0 = arith.constant 0 : index
    %0 = vector.load %arg1[%c0, %c0_0] : memref<16x128xf32, #tpu.memory_space<vmem>>, vector<16x128xf32>
    %1 = arith.truncf %0 : vector<16x128xf32> to vector<16x128xbf16>
    %c0_1 = arith.constant 0 : index
    %c0_2 = arith.constant 0 : index
    %2 = vector.load %arg2[%c0_1, %c0_2] : memref<128x128xbf16, #tpu.memory_space<vmem>>, vector<128x128xbf16>
    %cst = arith.constant dense<0.000000e+00> : vector<16x128xf32>
    %3 = tpu.matmul %1, %2, %cst {dimension_numbers = #tpu.dot_dimension_numbers<[1], [0], [0], [1], [0, 0, 1, 1], [], []>} : vector<16x128xbf16>, vector<128x128xbf16>, vector<16x128xf32> -> vector<16x128xf32>
    %c0_3 = arith.constant 0 : index
    %c0_4 = arith.constant 0 : index
    %4 = vector.load %arg3[%c0_3, %c0_4] : memref<1x128xf32, #tpu.memory_space<vmem>>, vector<1x128xf32>
    %5 = vector.broadcast %4 : vector<1x128xf32> to vector<16x128xf32>
    %6 = arith.addf %3, %5 : vector<16x128xf32>
    %cst_5 = arith.constant 0.000000e+00 : f32
    %7 = vector.broadcast %cst_5 : f32 to vector<16x128xf32>
    %8 = arith.maximumf %6, %7 : vector<16x128xf32>
    %9 = arith.truncf %8 : vector<16x128xf32> to vector<16x128xbf16>
    %c0_6 = arith.constant 0 : index
    %c0_7 = arith.constant 0 : index
    %10 = vector.load %arg4[%c0_6, %c0_7] : memref<128x128xbf16, #tpu.memory_space<vmem>>, vector<128x128xbf16>
    %cst_8 = arith.constant dense<0.000000e+00> : vector<16x128xf32>
    %11 = tpu.matmul %9, %10, %cst_8 {dimension_numbers = #tpu.dot_dimension_numbers<[1], [0], [0], [1], [0, 0, 1, 1], [], []>} : vector<16x128xbf16>, vector<128x128xbf16>, vector<16x128xf32> -> vector<16x128xf32>
    %c0_9 = arith.constant 0 : index
    %c0_10 = arith.constant 0 : index
    %12 = vector.load %arg5[%c0_9, %c0_10] : memref<1x128xf32, #tpu.memory_space<vmem>>, vector<1x128xf32>
    %13 = vector.broadcast %12 : vector<1x128xf32> to vector<16x128xf32>
    %14 = arith.addf %11, %13 : vector<16x128xf32>
    %cst_11 = arith.constant dense<0xFF800000> : vector<16xf32>
    %15 = vector.multi_reduction <maximumf>, %14, %cst_11 [1] : vector<16x128xf32> to vector<16xf32>
    %16 = vector.shape_cast %15 : vector<16xf32> to vector<16x1xf32>
    %17 = vector.broadcast %16 : vector<16x1xf32> to vector<16x128xf32>
    %18 = arith.subf %14, %17 : vector<16x128xf32>
    %19 = math.exp %18 : vector<16x128xf32>
    %cst_12 = arith.constant dense<0.000000e+00> : vector<16xf32>
    %20 = vector.multi_reduction <add>, %19, %cst_12 [1] : vector<16x128xf32> to vector<16xf32>
    %21 = vector.shape_cast %20 : vector<16xf32> to vector<16x1xf32>
    %22 = tpu.reciprocal %21 {approx = true} : vector<16x1xf32> -> vector<16x1xf32>
    %23 = vector.broadcast %22 : vector<16x1xf32> to vector<16x128xf32>
    %24 = arith.mulf %19, %23 : vector<16x128xf32>
    %25 = arith.truncf %24 : vector<16x128xf32> to vector<16x128xbf16>
    %26 = arith.mulf %9, %25 : vector<16x128xbf16>
    %c0_13 = arith.constant 0 : index
    %c0_14 = arith.constant 0 : index
    %27 = vector.load %arg6[%c0_13, %c0_14] : memref<128x128xbf16, #tpu.memory_space<vmem>>, vector<128x128xbf16>
    %cst_15 = arith.constant dense<0.000000e+00> : vector<16x128xf32>
    %28 = tpu.matmul %26, %27, %cst_15 {dimension_numbers = #tpu.dot_dimension_numbers<[1], [0], [0], [1], [0, 0, 1, 1], [], []>} : vector<16x128xbf16>, vector<128x128xbf16>, vector<16x128xf32> -> vector<16x128xf32>
    %c0_16 = arith.constant 0 : index
    %c0_17 = arith.constant 0 : index
    %29 = vector.load %arg7[%c0_16, %c0_17] : memref<1x128xf32, #tpu.memory_space<vmem>>, vector<1x128xf32>
    %30 = vector.broadcast %29 : vector<1x128xf32> to vector<16x128xf32>
    %31 = arith.addf %28, %30 : vector<16x128xf32>
    %c0_18 = arith.constant 0 : index
    %c0_19 = arith.constant 0 : index
    %32 = vector.load %arg8[%c0_18, %c0_19] : memref<16x128xf32, #tpu.memory_space<vmem>>, vector<16x128xf32>
    tpu.vector_store %arg8[%c0_18, %c0_19], %31 {strides = array<i32>} : memref<16x128xf32, #tpu.memory_space<vmem>>, vector<16x128xf32>,
    return
  }
  func.func @transform_0(%arg0: i32) -> (i32, i32) {
    %c0_i32 = arith.constant 0 : i32
    %c0_i32_0 = arith.constant 0 : i32
    return %arg0, %c0_i32 : i32, i32
  }
  func.func @transform_1(%arg0: i32) -> (i32, i32) {
    %c0_i32 = arith.constant 0 : i32
    %c0_i32_0 = arith.constant 0 : i32
    %c0_i32_1 = arith.constant 0 : i32
    return %c0_i32, %c0_i32_0 : i32, i32
  }
  func.func @transform_2(%arg0: i32) -> (i32, i32) {
    %c0_i32 = arith.constant 0 : i32
    %c0_i32_0 = arith.constant 0 : i32
    %c0_i32_1 = arith.constant 0 : i32
    return %c0_i32, %c0_i32_0 : i32, i32
  }
  func.func @transform_3(%arg0: i32) -> (i32, i32) {
    %c0_i32 = arith.constant 0 : i32
    %c0_i32_0 = arith.constant 0 : i32
    %c0_i32_1 = arith.constant 0 : i32
    return %c0_i32, %c0_i32_0 : i32, i32
  }
  func.func @transform_4(%arg0: i32) -> (i32, i32) {
    %c0_i32 = arith.constant 0 : i32
    %c0_i32_0 = arith.constant 0 : i32
    %c0_i32_1 = arith.constant 0 : i32
    return %c0_i32, %c0_i32_0 : i32, i32
  }
  func.func @transform_5(%arg0: i32) -> (i32, i32) {
    %c0_i32 = arith.constant 0 : i32
    %c0_i32_0 = arith.constant 0 : i32
    %c0_i32_1 = arith.constant 0 : i32
    return %c0_i32, %c0_i32_0 : i32, i32
  }
  func.func @transform_6(%arg0: i32) -> (i32, i32) {
    %c0_i32 = arith.constant 0 : i32
    %c0_i32_0 = arith.constant 0 : i32
    %c0_i32_1 = arith.constant 0 : i32
    return %c0_i32, %c0_i32_0 : i32, i32
  }
  func.func @transform_7(%arg0: i32) -> (i32, i32) {
    %c0_i32 = arith.constant 0 : i32
    %c0_i32_0 = arith.constant 0 : i32
    return %arg0, %c0_i32 : i32, i32
  }
}

module attributes {stable_mosaic.version = 11 : i64} {
  func.func @_feature_attn_kernel(%arg0: i32, %arg1: memref<16x128xf32, #tpu.memory_space<vmem>>, %arg2: memref<128x128xbf16, #tpu.memory_space<vmem>>, %arg3: memref<1x128xf32, #tpu.memory_space<vmem>>, %arg4: memref<128x128xbf16, #tpu.memory_space<vmem>>, %arg5: memref<1x128xf32, #tpu.memory_space<vmem>>, %arg6: memref<128x128xbf16, #tpu.memory_space<vmem>>, %arg7: memref<1x128xf32, #tpu.memory_space<vmem>>, %arg8: memref<16x128xf32, #tpu.memory_space<vmem>>) attributes {dimension_semantics = [#tpu.dimension_semantics<parallel>], iteration_bounds = array<i64: 1>, scalar_prefetch = 0 : i64, scratch_operands = 0 : i64, tpu.core_type = #tpu.core_type<tc>, window_params = [{transform_indices = @transform_0, window_bounds = array<i64: 16, 128>}, {pipeline_mode = #tpu.pipeline_mode<synchronous>, transform_indices = @transform_1, window_bounds = array<i64: 128, 128>}, {pipeline_mode = #tpu.pipeline_mode<synchronous>, transform_indices = @transform_2, window_bounds = array<i64: 1, 128>}, {pipeline_mode = #tpu.pipeline_mode<synchronous>, transform_indices = @transform_3, window_bounds = array<i64: 128, 128>}, {pipeline_mode = #tpu.pipeline_mode<synchronous>, transform_indices = @transform_4, window_bounds = array<i64: 1, 128>}, {pipeline_mode = #tpu.pipeline_mode<synchronous>, transform_indices = @transform_5, window_bounds = array<i64: 128, 128>}, {pipeline_mode = #tpu.pipeline_mode<synchronous>, transform_indices = @transform_6, window_bounds = array<i64: 1, 128>}, {transform_indices = @transform_7, window_bounds = array<i64: 16, 128>}]} {
    %c0 = arith.constant 0 : index
    %c0_0 = arith.constant 0 : index
    %0 = vector.load %arg1[%c0, %c0_0] : memref<16x128xf32, #tpu.memory_space<vmem>>, vector<16x128xf32>
    %1 = arith.truncf %0 : vector<16x128xf32> to vector<16x128xbf16>
    %c0_1 = arith.constant 0 : index
    %c0_2 = arith.constant 0 : index
    %2 = vector.load %arg2[%c0_1, %c0_2] : memref<128x128xbf16, #tpu.memory_space<vmem>>, vector<128x128xbf16>
    %cst = arith.constant dense<0.000000e+00> : vector<16x128xf32>
    %3 = tpu.matmul %1, %2, %cst {dimension_numbers = #tpu.dot_dimension_numbers<[1], [0], [0], [1], [0, 0, 1, 1], [], []>} : vector<16x128xbf16>, vector<128x128xbf16>, vector<16x128xf32> -> vector<16x128xf32>
    %c0_3 = arith.constant 0 : index
    %c0_4 = arith.constant 0 : index
    %4 = vector.load %arg3[%c0_3, %c0_4] : memref<1x128xf32, #tpu.memory_space<vmem>>, vector<1x128xf32>
    %5 = vector.broadcast %4 : vector<1x128xf32> to vector<16x128xf32>
    %6 = arith.addf %3, %5 : vector<16x128xf32>
    %cst_5 = arith.constant 0.000000e+00 : f32
    %7 = vector.broadcast %cst_5 : f32 to vector<16x128xf32>
    %8 = arith.maximumf %6, %7 : vector<16x128xf32>
    %9 = arith.truncf %8 : vector<16x128xf32> to vector<16x128xbf16>
    %c0_6 = arith.constant 0 : index
    %c0_7 = arith.constant 0 : index
    %10 = vector.load %arg4[%c0_6, %c0_7] : memref<128x128xbf16, #tpu.memory_space<vmem>>, vector<128x128xbf16>
    %cst_8 = arith.constant dense<0.000000e+00> : vector<16x128xf32>
    %11 = tpu.matmul %9, %10, %cst_8 {dimension_numbers = #tpu.dot_dimension_numbers<[1], [0], [0], [1], [0, 0, 1, 1], [], []>} : vector<16x128xbf16>, vector<128x128xbf16>, vector<16x128xf32> -> vector<16x128xf32>
    %c0_9 = arith.constant 0 : index
    %c0_10 = arith.constant 0 : index
    %12 = vector.load %arg5[%c0_9, %c0_10] : memref<1x128xf32, #tpu.memory_space<vmem>>, vector<1x128xf32>
    %13 = vector.broadcast %12 : vector<1x128xf32> to vector<16x128xf32>
    %14 = arith.addf %11, %13 : vector<16x128xf32>
    %cst_11 = arith.constant dense<0xFF800000> : vector<16xf32>
    %15 = vector.multi_reduction <maximumf>, %14, %cst_11 [1] : vector<16x128xf32> to vector<16xf32>
    %16 = vector.shape_cast %15 : vector<16xf32> to vector<16x1xf32>
    %17 = vector.broadcast %16 : vector<16x1xf32> to vector<16x128xf32>
    %18 = arith.subf %14, %17 : vector<16x128xf32>
    %19 = math.exp %18 : vector<16x128xf32>
    %cst_12 = arith.constant dense<0.000000e+00> : vector<16xf32>
    %20 = vector.multi_reduction <add>, %19, %cst_12 [1] : vector<16x128xf32> to vector<16xf32>
    %21 = vector.shape_cast %20 : vector<16xf32> to vector<16x1xf32>
    %22 = tpu.reciprocal %21 {approx = true} : vector<16x1xf32> -> vector<16x1xf32>
    %23 = vector.broadcast %22 : vector<16x1xf32> to vector<16x128xf32>
    %24 = arith.mulf %19, %23 : vector<16x128xf32>
    %25 = arith.truncf %24 : vector<16x128xf32> to vector<16x128xbf16>
    %26 = arith.mulf %9, %25 : vector<16x128xbf16>
    %c0_13 = arith.constant 0 : index
    %c0_14 = arith.constant 0 : index
    %27 = vector.load %arg6[%c0_13, %c0_14] : memref<128x128xbf16, #tpu.memory_space<vmem>>, vector<128x128xbf16>
    %cst_15 = arith.constant dense<0.000000e+00> : vector<16x128xf32>
    %28 = tpu.matmul %26, %27, %cst_15 {dimension_numbers = #tpu.dot_dimension_numbers<[1], [0], [0], [1], [0, 0, 1, 1], [], []>} : vector<16x128xbf16>, vector<128x128xbf16>, vector<16x128xf32> -> vector<16x128xf32>
    %c0_16 = arith.constant 0 : index
    %c0_17 = arith.constant 0 : index
    %29 = vector.load %arg7[%c0_16, %c0_17] : memref<1x128xf32, #tpu.memory_space<vmem>>, vector<1x128xf32>
    %30 = vector.broadcast %29 : vector<1x128xf32> to vector<16x128xf32>
    %31 = arith.addf %28, %30 : vector<16x128xf32>
    %c0_18 = arith.constant 0 : index
    %c0_19 = arith.constant 0 : index
    %32 = vector.load %arg8[%c0_18, %c0_19] : memref<16x128xf32, #tpu.memory_space<vmem>>, vector<16x128xf32>
    tpu.vector_store %arg8[%c0_18, %c0_19], %31 {strides = array<i32>} : memref<16x128xf32, #tpu.memory_space<vmem>>, vector<16x128xf32>,
    return
  }
  func.func @transform_0(%arg0: i32) -> (i32, i32) {
    %c0_i32 = arith.constant 0 : i32
    %c0_i32_0 = arith.constant 0 : i32
    return %arg0, %c0_i32 : i32, i32
  }
  func.func @transform_1(%arg0: i32) -> (i32, i32) {
    %c0_i32 = arith.constant 0 : i32
    %c0_i32_0 = arith.constant 0 : i32
    %c0_i32_1 = arith.constant 0 : i32
    return %c0_i32, %c0_i32_0 : i32, i32
  }
  func.func @transform_2(%arg0: i32) -> (i32, i32) {
    %c0_i32 = arith.constant 0 : i32
    %c0_i32_0 = arith.constant 0 : i32
    %c0_i32_1 = arith.constant 0 : i32
    return %c0_i32, %c0_i32_0 : i32, i32
  }
  func.func @transform_3(%arg0: i32) -> (i32, i32) {
    %c0_i32 = arith.constant 0 : i32
    %c0_i32_0 = arith.constant 0 : i32
    %c0_i32_1 = arith.constant 0 : i32
    return %c0_i32, %c0_i32_0 : i32, i32
  }
  func.func @transform_4(%arg0: i32) -> (i32, i32) {
    %c0_i32 = arith.constant 0 : i32
    %c0_i32_0 = arith.constant 0 : i32
    %c0_i32_1 = arith.constant 0 : i32
    return %c0_i32, %c0_i32_0 : i32, i32
  }
  func.func @transform_5(%arg0: i32) -> (i32, i32) {
    %c0_i32 = arith.constant 0 : i32
    %c0_i32_0 = arith.constant 0 : i32
    %c0_i32_1 = arith.constant 0 : i32
    return %c0_i32, %c0_i32_0 : i32, i32
  }
  func.func @transform_6(%arg0: i32) -> (i32, i32) {
    %c0_i32 = arith.constant 0 : i32
    %c0_i32_0 = arith.constant 0 : i32
    %c0_i32_1 = arith.constant 0 : i32
    return %c0_i32, %c0_i32_0 : i32, i32
  }
  func.func @transform_7(%arg0: i32) -> (i32, i32) {
    %c0_i32 = arith.constant 0 : i32
    %c0_i32_0 = arith.constant 0 : i32
    return %arg0, %c0_i32 : i32, i32
  }
}

</mosaic_0001>

<llo_original>
// kernel: tpu_custom_call.1
$region0: #{tpu_custom_call.1}
  #allocation0 [shape = 'u32[]', space=smem, size = 0x4, offset = 0x4, fixed_abs, tag = 'smem constant byte address 0x4 - core index']
  #allocation1 [shape = 'u32[144,128]{1,0:T(1,128)}', space=vmem, size = 0x12000, scoped, tag = 'internal scratch']
  %s0 = inlined_call_operand.hbm [shape: f32[16,128], index: 0, kind: input, shape index: {}]
  %s1 = inlined_call_operand.hbm [shape: bf16[128,128], index: 1, kind: input, shape index: {}]
  %s2 = inlined_call_operand.hbm [shape: f32[1,128], index: 2, kind: input, shape index: {}]
  %s3 = inlined_call_operand.hbm [shape: bf16[128,128], index: 3, kind: input, shape index: {}]
  %s4 = inlined_call_operand.hbm [shape: f32[1,128], index: 4, kind: input, shape index: {}]
  %s5 = inlined_call_operand.hbm [shape: bf16[128,128], index: 5, kind: input, shape index: {}]
  %s6 = inlined_call_operand.hbm [shape: f32[1,128], index: 6, kind: input, shape index: {}]
  %s7 = inlined_call_operand.hbm [shape: f32[16,128], index: 7, kind: output, shape index: {}]
  %s8 = sld [smem:[#allocation0]]
  $region66: #{tpu_custom_call.1} parent=0
    _
  %s10 = ssub.s32 1, %s8
  %s11 = scalar_select 0, %s10, %s8
  $region1: #{tpu_custom_call.1} parent=0
    #allocation2 [shape = 'u8[8192]{0}', space=vmem, size = 0x2000, scoped, tag = 'input window, operand 0, single buffered']
    #allocation3 [shape = 's32[1]{0}', space=sflag, size = 0x4, scoped, tag = 'scoped memory for tpu_custom_call.1']
    #allocation4 [shape = 's32[1]{0}', space=sflag, size = 0x4, scoped, tag = 'scoped memory for tpu_custom_call.1']
    #allocation5 [shape = 'u8[32768]{0}', space=vmem, size = 0x8000, scoped, tag = 'input window, operand 1, single buffered']
    #allocation6 [shape = 's32[1]{0}', space=sflag, size = 0x4, scoped, tag = 'scoped memory for tpu_custom_call.1']
    #allocation7 [shape = 'u8[512]{0}', space=vmem, size = 0x400, scoped, tag = 'input window, operand 2, single buffered']
    #allocation8 [shape = 'u8[32768]{0}', space=vmem, size = 0x8000, scoped, tag = 'input window, operand 3, single buffered']
    #allocation9 [shape = 's32[1]{0}', space=sflag, size = 0x4, scoped, tag = 'scoped memory for tpu_custom_call.1']
    #allocation10 [shape = 'u8[512]{0}', space=vmem, size = 0x400, scoped, tag = 'input window, operand 4, single buffered']
    #allocation11 [shape = 'u8[32768]{0}', space=vmem, size = 0x8000, scoped, tag = 'input window, operand 5, single buffered']
    #allocation12 [shape = 's32[1]{0}', space=sflag, size = 0x4, scoped, tag = 'scoped memory for tpu_custom_call.1']
    #allocation13 [shape = 'u8[512]{0}', space=vmem, size = 0x400, scoped, tag = 'input window, operand 6, single buffered']
    #allocation14 [shape = 'u8[8192]{0}', space=vmem, size = 0x2000, scoped, tag = 'output window, operand 0, single buffered']
    %12 = vsyncpa [#allocation3], 0
    %13 = vsyncpa [#allocation6], 0
    %14 = vsyncpa [#allocation9], 0
    %15 = vsyncpa [#allocation12], 0
    %16 = vsyncpa [#allocation4], 0
    // Predicated region
    $region2: #{tpu_custom_call.1} parent=1 // pred_check
      _
    $region3: #{tpu_custom_call.1} parent=1 // pred_check_branch
      %18 = sbr.rel (0) target = $region5
    $region4: #{tpu_custom_call.1} parent=1 // pred_region
      %s20 = ssub.s32 256, 256
      %21 = vsyncadd [#allocation3], %s20
      %s22 = sshll.u32 [#allocation2], 4
      %s23 = int_to_ptr.vmem [resolvable:$true] %s22
      %28 = dma.hbm_to_vmem [thread:$0]  %s0, 256, %s23, [#allocation3], 128, 128, 8
    $region5: #{tpu_custom_call.1} parent=1 // pred_fallthru
      _
    // Predicated region
    $region6: #{tpu_custom_call.1} parent=1 // pred_check
      _
    $region7: #{tpu_custom_call.1} parent=1 // pred_check_branch
      %30 = sbr.rel (0) target = $region9
    $region8: #{tpu_custom_call.1} parent=1 // pred_region
      %s32 = ssub.s32 1024, 1024
      %33 = vsyncadd [#allocation6], %s32
      %s34 = sshll.u32 [#allocation5], 4
      %s35 = int_to_ptr.vmem [resolvable:$true] %s34
      %40 = dma.hbm_to_vmem [thread:$0]  %s1, 1024, %s35, [#allocation6], 64, 64, 4
    $region9: #{tpu_custom_call.1} parent=1 // pred_fallthru
      _
    // Predicated region
    $region10: #{tpu_custom_call.1} parent=1 // pred_check
      _
    $region11: #{tpu_custom_call.1} parent=1 // pred_check_branch
      %42 = sbr.rel (0) target = $region13
    $region12: #{tpu_custom_call.1} parent=1 // pred_region
      %s44 = ssub.s32 16, 16
      %45 = vsyncadd [#allocation6], %s44
      %s47 = sshll.u32 [#allocation7], 4
      %s48 = int_to_ptr.vmem [resolvable:$true] %s47
      %50 = dma.hbm_to_vmem [thread:$0]  %s2, 16, %s48, [#allocation6]
    $region13: #{tpu_custom_call.1} parent=1 // pred_fallthru
      _
    // Predicated region
    $region14: #{tpu_custom_call.1} parent=1 // pred_check
      _
    $region15: #{tpu_custom_call.1} parent=1 // pred_check_branch
      %52 = sbr.rel (0) target = $region17
    $region16: #{tpu_custom_call.1} parent=1 // pred_region
      %s54 = ssub.s32 1024, 1024
      %55 = vsyncadd [#allocation9], %s54
      %s56 = sshll.u32 [#allocation8], 4
      %s57 = int_to_ptr.vmem [resolvable:$true] %s56
      %62 = dma.hbm_to_vmem [thread:$0]  %s3, 1024, %s57, [#allocation9], 64, 64, 4
    $region17: #{tpu_custom_call.1} parent=1 // pred_fallthru
      _
    // Predicated region
    $region18: #{tpu_custom_call.1} parent=1 // pred_check
      _
    $region19: #{tpu_custom_call.1} parent=1 // pred_check_branch
      %64 = sbr.rel (0) target = $region21
    $region20: #{tpu_custom_call.1} parent=1 // pred_region
      %s66 = ssub.s32 16, 16
      %67 = vsyncadd [#allocation9], %s66
      %s69 = sshll.u32 [#allocation10], 4
      %s70 = int_to_ptr.vmem [resolvable:$true] %s69
      %72 = dma.hbm_to_vmem [thread:$0]  %s4, 16, %s70, [#allocation9]
    $region21: #{tpu_custom_call.1} parent=1 // pred_fallthru
      _
    // Predicated region
    $region22: #{tpu_custom_call.1} parent=1 // pred_check
      _
    $region23: #{tpu_custom_call.1} parent=1 // pred_check_branch
      %74 = sbr.rel (0) target = $region25
    $region24: #{tpu_custom_call.1} parent=1 // pred_region
      %s76 = ssub.s32 1024, 1024
      %77 = vsyncadd [#allocation12], %s76
      %s78 = sshll.u32 [#allocation11], 4
      %s79 = int_to_ptr.vmem [resolvable:$true] %s78
      %84 = dma.hbm_to_vmem [thread:$0]  %s5, 1024, %s79, [#allocation12], 64, 64, 4
    $region25: #{tpu_custom_call.1} parent=1 // pred_fallthru
      _
    // Predicated region
    $region26: #{tpu_custom_call.1} parent=1 // pred_check
      _
    $region27: #{tpu_custom_call.1} parent=1 // pred_check_branch
      %86 = sbr.rel (0) target = $region29
    $region28: #{tpu_custom_call.1} parent=1 // pred_region
      %s88 = ssub.s32 16, 16
      %89 = vsyncadd [#allocation12], %s88
      %s91 = sshll.u32 [#allocation13], 4
      %s92 = int_to_ptr.vmem [resolvable:$true] %s91
      %94 = dma.hbm_to_vmem [thread:$0]  %s6, 16, %s92, [#allocation12]
    $region29: #{tpu_custom_call.1} parent=1 // pred_fallthru
      _
    // Predicated region
    $region30: #{tpu_custom_call.1} parent=1 // pred_check
      _
    $region31: #{tpu_custom_call.1} parent=1 // pred_check_branch
      %96 = sbr.rel (0) target = $region33
    $region32: #{tpu_custom_call.1} parent=1 // pred_region
      %97 = dma.done [#allocation3], 256
    $region33: #{tpu_custom_call.1} parent=1 // pred_fallthru
      _
    // Predicated region
    $region34: #{tpu_custom_call.1} parent=1 // pred_check
      _
    $region35: #{tpu_custom_call.1} parent=1 // pred_check_branch
      %99 = sbr.rel (0) target = $region37
    $region36: #{tpu_custom_call.1} parent=1 // pred_region
      %100 = dma.done [#allocation6], 1024
    $region37: #{tpu_custom_call.1} parent=1 // pred_fallthru
      _
    // Predicated region
    $region38: #{tpu_custom_call.1} parent=1 // pred_check
      _
    $region39: #{tpu_custom_call.1} parent=1 // pred_check_branch
      %102 = sbr.rel (0) target = $region41
    $region40: #{tpu_custom_call.1} parent=1 // pred_region
      %103 = dma.done [#allocation6], 16
    $region41: #{tpu_custom_call.1} parent=1 // pred_fallthru
      _
    // Predicated region
    $region42: #{tpu_custom_call.1} parent=1 // pred_check
      _
    $region43: #{tpu_custom_call.1} parent=1 // pred_check_branch
      %105 = sbr.rel (0) target = $region45
    $region44: #{tpu_custom_call.1} parent=1 // pred_region
      %106 = dma.done [#allocation9], 1024
    $region45: #{tpu_custom_call.1} parent=1 // pred_fallthru
      _
    // Predicated region
    $region46: #{tpu_custom_call.1} parent=1 // pred_check
      _
    $region47: #{tpu_custom_call.1} parent=1 // pred_check_branch
      %108 = sbr.rel (0) target = $region49
    $region48: #{tpu_custom_call.1} parent=1 // pred_region
      %109 = dma.done [#allocation9], 16
    $region49: #{tpu_custom_call.1} parent=1 // pred_fallthru
      _
    // Predicated region
    $region50: #{tpu_custom_call.1} parent=1 // pred_check
      _
    $region51: #{tpu_custom_call.1} parent=1 // pred_check_branch
      %111 = sbr.rel (0) target = $region53
    $region52: #{tpu_custom_call.1} parent=1 // pred_region
      %112 = dma.done [#allocation12], 1024
    $region53: #{tpu_custom_call.1} parent=1 // pred_fallthru
      _
    // Predicated region
    $region54: #{tpu_custom_call.1} parent=1 // pred_check
      _
    $region55: #{tpu_custom_call.1} parent=1 // pred_check_branch
      %114 = sbr.rel (0) target = $region57
    $region56: #{tpu_custom_call.1} parent=1 // pred_region
      %115 = dma.done [#allocation12], 16
    $region57: #{tpu_custom_call.1} parent=1 // pred_fallthru
      _
    %v117 = vld [vmem:[#allocation2] sm:$0xff]
    %v118 = vld [vmem:[#allocation2 + $0x8] sm:$0xff]
    %v119 = vpack.c.bf16 %v118, %v117
    %v120 = vld [vmem:[#allocation5] sm:$0xf]
    %v121 = vld [vmem:[#allocation5 + $0x4] sm:$0xf]
    %v122 = vld [vmem:[#allocation5 + $0x8] sm:$0xf]
    %v123 = vld [vmem:[#allocation5 + $0xc] sm:$0xf]
    %v124 = vld [vmem:[#allocation5 + $0x10] sm:$0xf]
    %v125 = vld [vmem:[#allocation5 + $0x14] sm:$0xf]
    %v126 = vld [vmem:[#allocation5 + $0x18] sm:$0xf]
    %v127 = vld [vmem:[#allocation5 + $0x1c] sm:$0xf]
    %v128 = vld [vmem:[#allocation5 + $0x20] sm:$0xf]
    %v129 = vld [vmem:[#allocation5 + $0x24] sm:$0xf]
    %v130 = vld [vmem:[#allocation5 + $0x28] sm:$0xf]
    %v131 = vld [vmem:[#allocation5 + $0x2c] sm:$0xf]
    %v132 = vld [vmem:[#allocation5 + $0x30] sm:$0xf]
    %v133 = vld [vmem:[#allocation5 + $0x34] sm:$0xf]
    %v134 = vld [vmem:[#allocation5 + $0x38] sm:$0xf]
    %v135 = vld [vmem:[#allocation5 + $0x3c] sm:$0xf]
    %v136 = vld [vmem:[#allocation7] sm:$0x1]
    %v138 = vlaneseq
    %v139 = vshrl.u32 %v138, 7
    %v140 = vsub.s32 0, %v139
    %v141 = vrot.slane %v136, %v140
    %v159 = vunpack.c.l.b16 %v120
    %v160 = vunpack.c.l.b16 %v121
    %v161 = vunpack.c.l.b16 %v122
    %v162 = vunpack.c.l.b16 %v123
    %v163 = vunpack.c.l.b16 %v124
    %v164 = vunpack.c.l.b16 %v125
    %v165 = vunpack.c.l.b16 %v126
    %v166 = vunpack.c.l.b16 %v127
    %v167 = vunpack.c.l.b16 %v128
    %v168 = vunpack.c.l.b16 %v129
    %v169 = vunpack.c.l.b16 %v130
    %v170 = vunpack.c.l.b16 %v131
    %v171 = vunpack.c.l.b16 %v132
    %v172 = vunpack.c.l.b16 %v133
    %v173 = vunpack.c.l.b16 %v134
    %v174 = vunpack.c.l.b16 %v135
    %v175 = vpack.c.b16 %v160, %v159
    %v176 = vpack.c.b16 %v162, %v161
    %v177 = vpack.c.b16 %v164, %v163
    %v178 = vpack.c.b16 %v166, %v165
    %v179 = vpack.c.b16 %v168, %v167
    %v180 = vpack.c.b16 %v170, %v169
    %v181 = vpack.c.b16 %v172, %v171
    %v182 = vpack.c.b16 %v174, %v173
    %191 = vmatprep.subr.bf16.mxu0 0
    %192 = vmatpush1.bf16.msra.mxu0 %v175
    %193 = vmatprep.subr.bf16.mxu0 0
    %194 = vmatpush1.bf16.msra.mxu0 %v176
    %195 = vmatprep.subr.bf16.mxu0 0
    %196 = vmatpush1.bf16.msra.mxu0 %v177
    %197 = vmatprep.subr.bf16.mxu0 0
    %198 = vmatpush1.bf16.msra.mxu0 %v178
    %199 = vmatprep.subr.bf16.mxu0 0
    %200 = vmatpush1.bf16.msra.mxu0 %v179
    %201 = vmatprep.subr.bf16.mxu0 0
    %202 = vmatpush1.bf16.msra.mxu0 %v180
    %203 = vmatprep.subr.bf16.mxu0 0
    %204 = vmatpush1.bf16.msra.mxu0 %v181
    %205 = vmatprep.subr.bf16.mxu0 0
    %206 = vmatpush1.bf16.msra.mxu0 %v182
    %207 = vmatprep.subr.bf16.mxu0 0
    %208 = vmatpush1.bf16.msra.mxu0 0
    %209 = vmatprep.subr.bf16.mxu0 0
    %210 = vmatpush1.bf16.msra.mxu0 0
    %211 = vmatprep.subr.bf16.mxu0 0
    %212 = vmatpush1.bf16.msra.mxu0 0
    %213 = vmatprep.subr.bf16.mxu0 0
    %214 = vmatpush1.bf16.msra.mxu0 0
    %215 = vmatprep.subr.bf16.mxu0 0
    %216 = vmatpush1.bf16.msra.mxu0 0
    %217 = vmatprep.subr.bf16.mxu0 0
    %218 = vmatpush1.bf16.msra.mxu0 0
    %219 = vmatprep.subr.bf16.mxu0 0
    %220 = vmatpush1.bf16.msra.mxu0 0
    %221 = vmatprep.subr.bf16.mxu0 0
    %222 = vmatpush1.bf16.msra.mxu0 0
    %223 = vmatprep.mubr.bf16.mxu0 0
    %224 = vmatmul.mubr.bf16.gmra.mrb[0].mxu0 %v119
    %v225 = vpop.f32.mrb[0].mxu0
    %v226 = vadd.f32 %v141, %v225
    %v227 = vpop.f32.mrb[0].mxu0
    %v228 = vpop.f32.mrb[0].mxu0
    %v229 = vadd.f32 %v141, %v228
    %v230 = vpop.f32.mrb[0].mxu0
    %231 = vdwg.mxu0
    %v232 = vmax.f32 %v226, 0.0
    %v233 = vmax.f32 %v229, 0.0
    %v234 = vpack.c.bf16 %v233, %v232
    %v235 = vld [vmem:[#allocation8] sm:$0xf]
    %v236 = vld [vmem:[#allocation8 + $0x4] sm:$0xf]
    %v237 = vld [vmem:[#allocation8 + $0x8] sm:$0xf]
    %v238 = vld [vmem:[#allocation8 + $0xc] sm:$0xf]
    %v239 = vld [vmem:[#allocation8 + $0x10] sm:$0xf]
    %v240 = vld [vmem:[#allocation8 + $0x14] sm:$0xf]
    %v241 = vld [vmem:[#allocation8 + $0x18] sm:$0xf]
    %v242 = vld [vmem:[#allocation8 + $0x1c] sm:$0xf]
    %v243 = vld [vmem:[#allocation8 + $0x20] sm:$0xf]
    %v244 = vld [vmem:[#allocation8 + $0x24] sm:$0xf]
    %v245 = vld [vmem:[#allocation8 + $0x28] sm:$0xf]
    %v246 = vld [vmem:[#allocation8 + $0x2c] sm:$0xf]
    %v247 = vld [vmem:[#allocation8 + $0x30] sm:$0xf]
    %v248 = vld [vmem:[#allocation8 + $0x34] sm:$0xf]
    %v249 = vld [vmem:[#allocation8 + $0x38] sm:$0xf]
    %v250 = vld [vmem:[#allocation8 + $0x3c] sm:$0xf]
    %v251 = vld [vmem:[#allocation10] sm:$0x1]
    %v253 = vlaneseq
    %v254 = vshrl.u32 %v253, 7
    %v255 = vsub.s32 0, %v254
    %v256 = vrot.slane %v251, %v255
    %v274 = vunpack.c.l.b16 %v235
    %v275 = vunpack.c.l.b16 %v236
    %v276 = vunpack.c.l.b16 %v237
    %v277 = vunpack.c.l.b16 %v238
    %v278 = vunpack.c.l.b16 %v239
    %v279 = vunpack.c.l.b16 %v240
    %v280 = vunpack.c.l.b16 %v241
    %v281 = vunpack.c.l.b16 %v242
    %v282 = vunpack.c.l.b16 %v243
    %v283 = vunpack.c.l.b16 %v244
    %v284 = vunpack.c.l.b16 %v245
    %v285 = vunpack.c.l.b16 %v246
    %v286 = vunpack.c.l.b16 %v247
    %v287 = vunpack.c.l.b16 %v248
    %v288 = vunpack.c.l.b16 %v249
    %v289 = vunpack.c.l.b16 %v250
    %v290 = vpack.c.b16 %v275, %v274
    %v291 = vpack.c.b16 %v277, %v276
    %v292 = vpack.c.b16 %v279, %v278
    %v293 = vpack.c.b16 %v281, %v280
    %v294 = vpack.c.b16 %v283, %v282
    %v295 = vpack.c.b16 %v285, %v284
    %v296 = vpack.c.b16 %v287, %v286
    %v297 = vpack.c.b16 %v289, %v288
    %306 = vmatprep.subr.bf16.mxu0 0
    %307 = vmatpush1.bf16.msra.mxu0 %v290
    %308 = vmatprep.subr.bf16.mxu0 0
    %309 = vmatpush1.bf16.msra.mxu0 %v291
    %310 = vmatprep.subr.bf16.mxu0 0
    %311 = vmatpush1.bf16.msra.mxu0 %v292
    %312 = vmatprep.subr.bf16.mxu0 0
    %313 = vmatpush1.bf16.msra.mxu0 %v293
    %314 = vmatprep.subr.bf16.mxu0 0
    %315 = vmatpush1.bf16.msra.mxu0 %v294
    %316 = vmatprep.subr.bf16.mxu0 0
    %317 = vmatpush1.bf16.msra.mxu0 %v295
    %318 = vmatprep.subr.bf16.mxu0 0
    %319 = vmatpush1.bf16.msra.mxu0 %v296
    %320 = vmatprep.subr.bf16.mxu0 0
    %321 = vmatpush1.bf16.msra.mxu0 %v297
    %322 = vmatprep.subr.bf16.mxu0 0
    %323 = vmatpush1.bf16.msra.mxu0 0
    %324 = vmatprep.subr.bf16.mxu0 0
    %325 = vmatpush1.bf16.msra.mxu0 0
    %326 = vmatprep.subr.bf16.mxu0 0
    %327 = vmatpush1.bf16.msra.mxu0 0
    %328 = vmatprep.subr.bf16.mxu0 0
    %329 = vmatpush1.bf16.msra.mxu0 0
    %330 = vmatprep.subr.bf16.mxu0 0
    %331 = vmatpush1.bf16.msra.mxu0 0
    %332 = vmatprep.subr.bf16.mxu0 0
    %333 = vmatpush1.bf16.msra.mxu0 0
    %334 = vmatprep.subr.bf16.mxu0 0
    %335 = vmatpush1.bf16.msra.mxu0 0
    %336 = vmatprep.subr.bf16.mxu0 0
    %337 = vmatpush1.bf16.msra.mxu0 0
    %338 = vmatprep.mubr.bf16.mxu0 0
    %339 = vmatmul.mubr.bf16.gmra.mrb[0].mxu0 %v234
    %v340 = vpop.f32.mrb[0].mxu0
    %v341 = vadd.f32 %v256, %v340
    %v342 = vpop.f32.mrb[0].mxu0
    %v343 = vpop.f32.mrb[0].mxu0
    %v344 = vadd.f32 %v256, %v343
    %v345 = vpop.f32.mrb[0].mxu0
    %346 = vdwg.mxu0
    %347 = vmax.xlane.f32.xlu0 %v341
    %v348 = vpop.xlane.xlu0 %347
    %349 = vmax.xlane.f32.xlu0 %v344
    %v350 = vpop.xlane.xlu0 %349
    %v351 = vsub.f32 %v341, %v348
    %v352 = vsub.f32 %v344, %v350
    %v353 = vmul.f32 %v351, 1.442695
    %v354 = vpow.pop %v353
    %v355 = vmul.f32 %v352, 1.442695
    %v356 = vpow.pop %v355
    %357 = vadd.xlane.f32.xlu0 %v354
    %v358 = vpop.xlane.xlu0 %357
    %359 = vadd.xlane.f32.xlu0 %v356
    %v360 = vpop.xlane.xlu0 %359
    %v361 = vrcp.pop %v358
    %v362 = vrcp.pop %v360
    %v363 = vmul.f32 %v354, %v361
    %v364 = vmul.f32 %v356, %v362
    %v365 = vpack.c.bf16 %v364, %v363
    %v366 = vmul.bf16 %v234, %v365
    %v367 = vld [vmem:[#allocation11] sm:$0xf]
    %v368 = vld [vmem:[#allocation11 + $0x4] sm:$0xf]
    %v369 = vld [vmem:[#allocation11 + $0x8] sm:$0xf]
    %v370 = vld [vmem:[#allocation11 + $0xc] sm:$0xf]
    %v371 = vld [vmem:[#allocation11 + $0x10] sm:$0xf]
    %v372 = vld [vmem:[#allocation11 + $0x14] sm:$0xf]
    %v373 = vld [vmem:[#allocation11 + $0x18] sm:$0xf]
    %v374 = vld [vmem:[#allocation11 + $0x1c] sm:$0xf]
    %v375 = vld [vmem:[#allocation11 + $0x20] sm:$0xf]
    %v376 = vld [vmem:[#allocation11 + $0x24] sm:$0xf]
    %v377 = vld [vmem:[#allocation11 + $0x28] sm:$0xf]
    %v378 = vld [vmem:[#allocation11 + $0x2c] sm:$0xf]
    %v379 = vld [vmem:[#allocation11 + $0x30] sm:$0xf]
    %v380 = vld [vmem:[#allocation11 + $0x34] sm:$0xf]
    %v381 = vld [vmem:[#allocation11 + $0x38] sm:$0xf]
    %v382 = vld [vmem:[#allocation11 + $0x3c] sm:$0xf]
    %v383 = vld [vmem:[#allocation13] sm:$0x1]
    %v385 = vlaneseq
    %v386 = vshrl.u32 %v385, 7
    %v387 = vsub.s32 0, %v386
    %v388 = vrot.slane %v383, %v387
    %v406 = vunpack.c.l.b16 %v367
    %v407 = vunpack.c.l.b16 %v368
    %v408 = vunpack.c.l.b16 %v369
    %v409 = vunpack.c.l.b16 %v370
    %v410 = vunpack.c.l.b16 %v371
    %v411 = vunpack.c.l.b16 %v372
    %v412 = vunpack.c.l.b16 %v373
    %v413 = vunpack.c.l.b16 %v374
    %v414 = vunpack.c.l.b16 %v375
    %v415 = vunpack.c.l.b16 %v376
    %v416 = vunpack.c.l.b16 %v377
    %v417 = vunpack.c.l.b16 %v378
    %v418 = vunpack.c.l.b16 %v379
    %v419 = vunpack.c.l.b16 %v380
    %v420 = vunpack.c.l.b16 %v381
    %v421 = vunpack.c.l.b16 %v382
    %v422 = vpack.c.b16 %v407, %v406
    %v423 = vpack.c.b16 %v409, %v408
    %v424 = vpack.c.b16 %v411, %v410
    %v425 = vpack.c.b16 %v413, %v412
    %v426 = vpack.c.b16 %v415, %v414
    %v427 = vpack.c.b16 %v417, %v416
    %v428 = vpack.c.b16 %v419, %v418
    %v429 = vpack.c.b16 %v421, %v420
    %438 = vmatprep.subr.bf16.mxu0 0
    %439 = vmatpush1.bf16.msra.mxu0 %v422
    %440 = vmatprep.subr.bf16.mxu0 0
    %441 = vmatpush1.bf16.msra.mxu0 %v423
    %442 = vmatprep.subr.bf16.mxu0 0
    %443 = vmatpush1.bf16.msra.mxu0 %v424
    %444 = vmatprep.subr.bf16.mxu0 0
    %445 = vmatpush1.bf16.msra.mxu0 %v425
    %446 = vmatprep.subr.bf16.mxu0 0
    %447 = vmatpush1.bf16.msra.mxu0 %v426
    %448 = vmatprep.subr.bf16.mxu0 0
    %449 = vmatpush1.bf16.msra.mxu0 %v427
    %450 = vmatprep.subr.bf16.mxu0 0
    %451 = vmatpush1.bf16.msra.mxu0 %v428
    %452 = vmatprep.subr.bf16.mxu0 0
    %453 = vmatpush1.bf16.msra.mxu0 %v429
    %454 = vmatprep.subr.bf16.mxu0 0
    %455 = vmatpush1.bf16.msra.mxu0 0
    %456 = vmatprep.subr.bf16.mxu0 0
    %457 = vmatpush1.bf16.msra.mxu0 0
    %458 = vmatprep.subr.bf16.mxu0 0
    %459 = vmatpush1.bf16.msra.mxu0 0
    %460 = vmatprep.subr.bf16.mxu0 0
    %461 = vmatpush1.bf16.msra.mxu0 0
    %462 = vmatprep.subr.bf16.mxu0 0
    %463 = vmatpush1.bf16.msra.mxu0 0
    %464 = vmatprep.subr.bf16.mxu0 0
    %465 = vmatpush1.bf16.msra.mxu0 0
    %466 = vmatprep.subr.bf16.mxu0 0
    %467 = vmatpush1.bf16.msra.mxu0 0
    %468 = vmatprep.subr.bf16.mxu0 0
    %469 = vmatpush1.bf16.msra.mxu0 0
    %470 = vmatprep.mubr.bf16.mxu0 0
    %471 = vmatmul.mubr.bf16.gmra.mrb[0].mxu0 %v366
    %v472 = vpop.f32.mrb[0].mxu0
    %v473 = vadd.f32 %v388, %v472
    %v474 = vpop.f32.mrb[0].mxu0
    %v475 = vpop.f32.mrb[0].mxu0
    %v476 = vadd.f32 %v388, %v475
    %v477 = vpop.f32.mrb[0].mxu0
    %478 = vdwg.mxu0
    %479 = vst [vmem:[#allocation14] sm:$0xff] %v473
    %480 = vst [vmem:[#allocation14 + $0x8] sm:$0xff] %v476
    // Predicated region
    $region58: #{tpu_custom_call.1} parent=1 // pred_check
      _
    $region59: #{tpu_custom_call.1} parent=1 // pred_check_branch
      %482 = sbr.rel (0) target = $region61
    $region60: #{tpu_custom_call.1} parent=1 // pred_region
      %s484 = ssub.s32 256, 256
      %485 = vsyncadd [#allocation4], %s484
      %s486 = sshll.u32 [#allocation14], 4
      %s487 = int_to_ptr.vmem [resolvable:$true] %s486
      %492 = dma.vmem_to_hbm [thread:$0]  %s487, 256, %s7, [#allocation4], 128, 128, 8
    $region61: #{tpu_custom_call.1} parent=1 // pred_fallthru
      _
    // Predicated region
    $region62: #{tpu_custom_call.1} parent=1 // pred_check
      _
    $region63: #{tpu_custom_call.1} parent=1 // pred_check_branch
      %494 = sbr.rel (0) target = $region65
    $region64: #{tpu_custom_call.1} parent=1 // pred_region
      %495 = dma.done [#allocation4], 256
    $region65: #{tpu_custom_call.1} parent=1 // pred_fallthru
      _
    %496 = vsyncpa [#allocation3], 1
    %497 = vsyncpa [#allocation6], 1
    %498 = vsyncpa [#allocation9], 1
    %499 = vsyncpa [#allocation12], 1
    %500 = vsyncpa [#allocation4], 1

// kernel: tpu_custom_call.1
$region0: #{tpu_custom_call.1}
  #allocation0 [shape = 'u32[]', space=smem, size = 0x4, offset = 0x4, fixed_abs, tag = 'smem constant byte address 0x4 - core index']
  #allocation1 [shape = 'u32[144,128]{1,0:T(1,128)}', space=vmem, size = 0x12000, scoped, tag = 'internal scratch']
  %s0 = inlined_call_operand.hbm [shape: f32[16,128], index: 0, kind: input, shape index: {}]
  %s1 = inlined_call_operand.hbm [shape: bf16[128,128], index: 1, kind: input, shape index: {}]
  %s2 = inlined_call_operand.hbm [shape: f32[1,128], index: 2, kind: input, shape index: {}]
  %s3 = inlined_call_operand.hbm [shape: bf16[128,128], index: 3, kind: input, shape index: {}]
  %s4 = inlined_call_operand.hbm [shape: f32[1,128], index: 4, kind: input, shape index: {}]
  %s5 = inlined_call_operand.hbm [shape: bf16[128,128], index: 5, kind: input, shape index: {}]
  %s6 = inlined_call_operand.hbm [shape: f32[1,128], index: 6, kind: input, shape index: {}]
  %s7 = inlined_call_operand.hbm [shape: f32[16,128], index: 7, kind: output, shape index: {}]
  %s8 = sld [smem:[#allocation0]]
  $region66: #{tpu_custom_call.1} parent=0
    _
  %s10 = ssub.s32 1, %s8
  %s11 = scalar_select 0, %s10, %s8
  $region1: #{tpu_custom_call.1} parent=0
    #allocation2 [shape = 'u8[8192]{0}', space=vmem, size = 0x2000, scoped, tag = 'input window, operand 0, single buffered']
    #allocation3 [shape = 's32[1]{0}', space=sflag, size = 0x4, scoped, tag = 'scoped memory for tpu_custom_call.1']
    #allocation4 [shape = 's32[1]{0}', space=sflag, size = 0x4, scoped, tag = 'scoped memory for tpu_custom_call.1']
    #allocation5 [shape = 'u8[32768]{0}', space=vmem, size = 0x8000, scoped, tag = 'input window, operand 1, single buffered']
    #allocation6 [shape = 's32[1]{0}', space=sflag, size = 0x4, scoped, tag = 'scoped memory for tpu_custom_call.1']
    #allocation7 [shape = 'u8[512]{0}', space=vmem, size = 0x400, scoped, tag = 'input window, operand 2, single buffered']
    #allocation8 [shape = 'u8[32768]{0}', space=vmem, size = 0x8000, scoped, tag = 'input window, operand 3, single buffered']
    #allocation9 [shape = 's32[1]{0}', space=sflag, size = 0x4, scoped, tag = 'scoped memory for tpu_custom_call.1']
    #allocation10 [shape = 'u8[512]{0}', space=vmem, size = 0x400, scoped, tag = 'input window, operand 4, single buffered']
    #allocation11 [shape = 'u8[32768]{0}', space=vmem, size = 0x8000, scoped, tag = 'input window, operand 5, single buffered']
    #allocation12 [shape = 's32[1]{0}', space=sflag, size = 0x4, scoped, tag = 'scoped memory for tpu_custom_call.1']
    #allocation13 [shape = 'u8[512]{0}', space=vmem, size = 0x400, scoped, tag = 'input window, operand 6, single buffered']
    #allocation14 [shape = 'u8[8192]{0}', space=vmem, size = 0x2000, scoped, tag = 'output window, operand 0, single buffered']
    %12 = vsyncpa [#allocation3], 0
    %13 = vsyncpa [#allocation6], 0
    %14 = vsyncpa [#allocation9], 0
    %15 = vsyncpa [#allocation12], 0
    %16 = vsyncpa [#allocation4], 0
    // Predicated region
    $region2: #{tpu_custom_call.1} parent=1 // pred_check
      _
    $region3: #{tpu_custom_call.1} parent=1 // pred_check_branch
      %18 = sbr.rel (0) target = $region5
    $region4: #{tpu_custom_call.1} parent=1 // pred_region
      %s20 = ssub.s32 256, 256
      %21 = vsyncadd [#allocation3], %s20
      %s22 = sshll.u32 [#allocation2], 4
      %s23 = int_to_ptr.vmem [resolvable:$true] %s22
      %28 = dma.hbm_to_vmem [thread:$0]  %s0, 256, %s23, [#allocation3], 128, 128, 8
    $region5: #{tpu_custom_call.1} parent=1 // pred_fallthru
      _
    // Predicated region
    $region6: #{tpu_custom_call.1} parent=1 // pred_check
      _
    $region7: #{tpu_custom_call.1} parent=1 // pred_check_branch
      %30 = sbr.rel (0) target = $region9
    $region8: #{tpu_custom_call.1} parent=1 // pred_region
      %s32 = ssub.s32 1024, 1024
      %33 = vsyncadd [#allocation6], %s32
      %s34 = sshll.u32 [#allocation5], 4
      %s35 = int_to_ptr.vmem [resolvable:$true] %s34
      %40 = dma.hbm_to_vmem [thread:$0]  %s1, 1024, %s35, [#allocation6], 64, 64, 4
    $region9: #{tpu_custom_call.1} parent=1 // pred_fallthru
      _
    // Predicated region
    $region10: #{tpu_custom_call.1} parent=1 // pred_check
      _
    $region11: #{tpu_custom_call.1} parent=1 // pred_check_branch
      %42 = sbr.rel (0) target = $region13
    $region12: #{tpu_custom_call.1} parent=1 // pred_region
      %s44 = ssub.s32 16, 16
      %45 = vsyncadd [#allocation6], %s44
      %s47 = sshll.u32 [#allocation7], 4
      %s48 = int_to_ptr.vmem [resolvable:$true] %s47
      %50 = dma.hbm_to_vmem [thread:$0]  %s2, 16, %s48, [#allocation6]
    $region13: #{tpu_custom_call.1} parent=1 // pred_fallthru
      _
    // Predicated region
    $region14: #{tpu_custom_call.1} parent=1 // pred_check
      _
    $region15: #{tpu_custom_call.1} parent=1 // pred_check_branch
      %52 = sbr.rel (0) target = $region17
    $region16: #{tpu_custom_call.1} parent=1 // pred_region
      %s54 = ssub.s32 1024, 1024
      %55 = vsyncadd [#allocation9], %s54
      %s56 = sshll.u32 [#allocation8], 4
      %s57 = int_to_ptr.vmem [resolvable:$true] %s56
      %62 = dma.hbm_to_vmem [thread:$0]  %s3, 1024, %s57, [#allocation9], 64, 64, 4
    $region17: #{tpu_custom_call.1} parent=1 // pred_fallthru
      _
    // Predicated region
    $region18: #{tpu_custom_call.1} parent=1 // pred_check
      _
    $region19: #{tpu_custom_call.1} parent=1 // pred_check_branch
      %64 = sbr.rel (0) target = $region21
    $region20: #{tpu_custom_call.1} parent=1 // pred_region
      %s66 = ssub.s32 16, 16
      %67 = vsyncadd [#allocation9], %s66
      %s69 = sshll.u32 [#allocation10], 4
      %s70 = int_to_ptr.vmem [resolvable:$true] %s69
      %72 = dma.hbm_to_vmem [thread:$0]  %s4, 16, %s70, [#allocation9]
    $region21: #{tpu_custom_call.1} parent=1 // pred_fallthru
      _
    // Predicated region
    $region22: #{tpu_custom_call.1} parent=1 // pred_check
      _
    $region23: #{tpu_custom_call.1} parent=1 // pred_check_branch
      %74 = sbr.rel (0) target = $region25
    $region24: #{tpu_custom_call.1} parent=1 // pred_region
      %s76 = ssub.s32 1024, 1024
      %77 = vsyncadd [#allocation12], %s76
      %s78 = sshll.u32 [#allocation11], 4
      %s79 = int_to_ptr.vmem [resolvable:$true] %s78
      %84 = dma.hbm_to_vmem [thread:$0]  %s5, 1024, %s79, [#allocation12], 64, 64, 4
    $region25: #{tpu_custom_call.1} parent=1 // pred_fallthru
      _
    // Predicated region
    $region26: #{tpu_custom_call.1} parent=1 // pred_check
      _
    $region27: #{tpu_custom_call.1} parent=1 // pred_check_branch
      %86 = sbr.rel (0) target = $region29
    $region28: #{tpu_custom_call.1} parent=1 // pred_region
      %s88 = ssub.s32 16, 16
      %89 = vsyncadd [#allocation12], %s88
      %s91 = sshll.u32 [#allocation13], 4
      %s92 = int_to_ptr.vmem [resolvable:$true] %s91
      %94 = dma.hbm_to_vmem [thread:$0]  %s6, 16, %s92, [#allocation12]
    $region29: #{tpu_custom_call.1} parent=1 // pred_fallthru
      _
    // Predicated region
    $region30: #{tpu_custom_call.1} parent=1 // pred_check
      _
    $region31: #{tpu_custom_call.1} parent=1 // pred_check_branch
      %96 = sbr.rel (0) target = $region33
    $region32: #{tpu_custom_call.1} parent=1 // pred_region
      %97 = dma.done [#allocation3], 256
    $region33: #{tpu_custom_call.1} parent=1 // pred_fallthru
      _
    // Predicated region
    $region34: #{tpu_custom_call.1} parent=1 // pred_check
      _
    $region35: #{tpu_custom_call.1} parent=1 // pred_check_branch
      %99 = sbr.rel (0) target = $region37
    $region36: #{tpu_custom_call.1} parent=1 // pred_region
      %100 = dma.done [#allocation6], 1024
    $region37: #{tpu_custom_call.1} parent=1 // pred_fallthru
      _
    // Predicated region
    $region38: #{tpu_custom_call.1} parent=1 // pred_check
      _
    $region39: #{tpu_custom_call.1} parent=1 // pred_check_branch
      %102 = sbr.rel (0) target = $region41
    $region40: #{tpu_custom_call.1} parent=1 // pred_region
      %103 = dma.done [#allocation6], 16
    $region41: #{tpu_custom_call.1} parent=1 // pred_fallthru
      _
    // Predicated region
    $region42: #{tpu_custom_call.1} parent=1 // pred_check
      _
    $region43: #{tpu_custom_call.1} parent=1 // pred_check_branch
      %105 = sbr.rel (0) target = $region45
    $region44: #{tpu_custom_call.1} parent=1 // pred_region
      %106 = dma.done [#allocation9], 1024
    $region45: #{tpu_custom_call.1} parent=1 // pred_fallthru
      _
    // Predicated region
    $region46: #{tpu_custom_call.1} parent=1 // pred_check
      _
    $region47: #{tpu_custom_call.1} parent=1 // pred_check_branch
      %108 = sbr.rel (0) target = $region49
    $region48: #{tpu_custom_call.1} parent=1 // pred_region
      %109 = dma.done [#allocation9], 16
    $region49: #{tpu_custom_call.1} parent=1 // pred_fallthru
      _
    // Predicated region
    $region50: #{tpu_custom_call.1} parent=1 // pred_check
      _
    $region51: #{tpu_custom_call.1} parent=1 // pred_check_branch
      %111 = sbr.rel (0) target = $region53
    $region52: #{tpu_custom_call.1} parent=1 // pred_region
      %112 = dma.done [#allocation12], 1024
    $region53: #{tpu_custom_call.1} parent=1 // pred_fallthru
      _
    // Predicated region
    $region54: #{tpu_custom_call.1} parent=1 // pred_check
      _
    $region55: #{tpu_custom_call.1} parent=1 // pred_check_branch
      %114 = sbr.rel (0) target = $region57
    $region56: #{tpu_custom_call.1} parent=1 // pred_region
      %115 = dma.done [#allocation12], 16
    $region57: #{tpu_custom_call.1} parent=1 // pred_fallthru
      _
    %v117 = vld [vmem:[#allocation2] sm:$0xff]
    %v118 = vld [vmem:[#allocation2 + $0x8] sm:$0xff]
    %v119 = vpack.c.bf16 %v118, %v117
    %v120 = vld [vmem:[#allocation5] sm:$0xf]
    %v121 = vld [vmem:[#allocation5 + $0x4] sm:$0xf]
    %v122 = vld [vmem:[#allocation5 + $0x8] sm:$0xf]
    %v123 = vld [vmem:[#allocation5 + $0xc] sm:$0xf]
    %v124 = vld [vmem:[#allocation5 + $0x10] sm:$0xf]
    %v125 = vld [vmem:[#allocation5 + $0x14] sm:$0xf]
    %v126 = vld [vmem:[#allocation5 + $0x18] sm:$0xf]
    %v127 = vld [vmem:[#allocation5 + $0x1c] sm:$0xf]
    %v128 = vld [vmem:[#allocation5 + $0x20] sm:$0xf]
    %v129 = vld [vmem:[#allocation5 + $0x24] sm:$0xf]
    %v130 = vld [vmem:[#allocation5 + $0x28] sm:$0xf]
    %v131 = vld [vmem:[#allocation5 + $0x2c] sm:$0xf]
    %v132 = vld [vmem:[#allocation5 + $0x30] sm:$0xf]
    %v133 = vld [vmem:[#allocation5 + $0x34] sm:$0xf]
    %v134 = vld [vmem:[#allocation5 + $0x38] sm:$0xf]
    %v135 = vld [vmem:[#allocation5 + $0x3c] sm:$0xf]
    %v136 = vld [vmem:[#allocation7] sm:$0x1]
    %v138 = vlaneseq
    %v139 = vshrl.u32 %v138, 7
    %v140 = vsub.s32 0, %v139
    %v141 = vrot.slane %v136, %v140
    %v159 = vunpack.c.l.b16 %v120
    %v160 = vunpack.c.l.b16 %v121
    %v161 = vunpack.c.l.b16 %v122
    %v162 = vunpack.c.l.b16 %v123
    %v163 = vunpack.c.l.b16 %v124
    %v164 = vunpack.c.l.b16 %v125
    %v165 = vunpack.c.l.b16 %v126
    %v166 = vunpack.c.l.b16 %v127
    %v167 = vunpack.c.l.b16 %v128
    %v168 = vunpack.c.l.b16 %v129
    %v169 = vunpack.c.l.b16 %v130
    %v170 = vunpack.c.l.b16 %v131
    %v171 = vunpack.c.l.b16 %v132
    %v172 = vunpack.c.l.b16 %v133
    %v173 = vunpack.c.l.b16 %v134
    %v174 = vunpack.c.l.b16 %v135
    %v175 = vpack.c.b16 %v160, %v159
    %v176 = vpack.c.b16 %v162, %v161
    %v177 = vpack.c.b16 %v164, %v163
    %v178 = vpack.c.b16 %v166, %v165
    %v179 = vpack.c.b16 %v168, %v167
    %v180 = vpack.c.b16 %v170, %v169
    %v181 = vpack.c.b16 %v172, %v171
    %v182 = vpack.c.b16 %v174, %v173
    %191 = vmatprep.subr.bf16.mxu0 0
    %192 = vmatpush1.bf16.msra.mxu0 %v175
    %193 = vmatprep.subr.bf16.mxu0 0
    %194 = vmatpush1.bf16.msra.mxu0 %v176
    %195 = vmatprep.subr.bf16.mxu0 0
    %196 = vmatpush1.bf16.msra.mxu0 %v177
    %197 = vmatprep.subr.bf16.mxu0 0
    %198 = vmatpush1.bf16.msra.mxu0 %v178
    %199 = vmatprep.subr.bf16.mxu0 0
    %200 = vmatpush1.bf16.msra.mxu0 %v179
    %201 = vmatprep.subr.bf16.mxu0 0
    %202 = vmatpush1.bf16.msra.mxu0 %v180
    %203 = vmatprep.subr.bf16.mxu0 0
    %204 = vmatpush1.bf16.msra.mxu0 %v181
    %205 = vmatprep.subr.bf16.mxu0 0
    %206 = vmatpush1.bf16.msra.mxu0 %v182
    %207 = vmatprep.subr.bf16.mxu0 0
    %208 = vmatpush1.bf16.msra.mxu0 0
    %209 = vmatprep.subr.bf16.mxu0 0
    %210 = vmatpush1.bf16.msra.mxu0 0
    %211 = vmatprep.subr.bf16.mxu0 0
    %212 = vmatpush1.bf16.msra.mxu0 0
    %213 = vmatprep.subr.bf16.mxu0 0
    %214 = vmatpush1.bf16.msra.mxu0 0
    %215 = vmatprep.subr.bf16.mxu0 0
    %216 = vmatpush1.bf16.msra.mxu0 0
    %217 = vmatprep.subr.bf16.mxu0 0
    %218 = vmatpush1.bf16.msra.mxu0 0
    %219 = vmatprep.subr.bf16.mxu0 0
    %220 = vmatpush1.bf16.msra.mxu0 0
    %221 = vmatprep.subr.bf16.mxu0 0
    %222 = vmatpush1.bf16.msra.mxu0 0
    %223 = vmatprep.mubr.bf16.mxu0 0
    %224 = vmatmul.mubr.bf16.gmra.mrb[0].mxu0 %v119
    %v225 = vpop.f32.mrb[0].mxu0
    %v226 = vadd.f32 %v141, %v225
    %v227 = vpop.f32.mrb[0].mxu0
    %v228 = vpop.f32.mrb[0].mxu0
    %v229 = vadd.f32 %v141, %v228
    %v230 = vpop.f32.mrb[0].mxu0
    %231 = vdwg.mxu0
    %v232 = vmax.f32 %v226, 0.0
    %v233 = vmax.f32 %v229, 0.0
    %v234 = vpack.c.bf16 %v233, %v232
    %v235 = vld [vmem:[#allocation8] sm:$0xf]
    %v236 = vld [vmem:[#allocation8 + $0x4] sm:$0xf]
    %v237 = vld [vmem:[#allocation8 + $0x8] sm:$0xf]
    %v238 = vld [vmem:[#allocation8 + $0xc] sm:$0xf]
    %v239 = vld [vmem:[#allocation8 + $0x10] sm:$0xf]
    %v240 = vld [vmem:[#allocation8 + $0x14] sm:$0xf]
    %v241 = vld [vmem:[#allocation8 + $0x18] sm:$0xf]
    %v242 = vld [vmem:[#allocation8 + $0x1c] sm:$0xf]
    %v243 = vld [vmem:[#allocation8 + $0x20] sm:$0xf]
    %v244 = vld [vmem:[#allocation8 + $0x24] sm:$0xf]
    %v245 = vld [vmem:[#allocation8 + $0x28] sm:$0xf]
    %v246 = vld [vmem:[#allocation8 + $0x2c] sm:$0xf]
    %v247 = vld [vmem:[#allocation8 + $0x30] sm:$0xf]
    %v248 = vld [vmem:[#allocation8 + $0x34] sm:$0xf]
    %v249 = vld [vmem:[#allocation8 + $0x38] sm:$0xf]
    %v250 = vld [vmem:[#allocation8 + $0x3c] sm:$0xf]
    %v251 = vld [vmem:[#allocation10] sm:$0x1]
    %v253 = vlaneseq
    %v254 = vshrl.u32 %v253, 7
    %v255 = vsub.s32 0, %v254
    %v256 = vrot.slane %v251, %v255
    %v274 = vunpack.c.l.b16 %v235
    %v275 = vunpack.c.l.b16 %v236
    %v276 = vunpack.c.l.b16 %v237
    %v277 = vunpack.c.l.b16 %v238
    %v278 = vunpack.c.l.b16 %v239
    %v279 = vunpack.c.l.b16 %v240
    %v280 = vunpack.c.l.b16 %v241
    %v281 = vunpack.c.l.b16 %v242
    %v282 = vunpack.c.l.b16 %v243
    %v283 = vunpack.c.l.b16 %v244
    %v284 = vunpack.c.l.b16 %v245
    %v285 = vunpack.c.l.b16 %v246
    %v286 = vunpack.c.l.b16 %v247
    %v287 = vunpack.c.l.b16 %v248
    %v288 = vunpack.c.l.b16 %v249
    %v289 = vunpack.c.l.b16 %v250
    %v290 = vpack.c.b16 %v275, %v274
    %v291 = vpack.c.b16 %v277, %v276
    %v292 = vpack.c.b16 %v279, %v278
    %v293 = vpack.c.b16 %v281, %v280
    %v294 = vpack.c.b16 %v283, %v282
    %v295 = vpack.c.b16 %v285, %v284
    %v296 = vpack.c.b16 %v287, %v286
    %v297 = vpack.c.b16 %v289, %v288
    %306 = vmatprep.subr.bf16.mxu0 0
    %307 = vmatpush1.bf16.msra.mxu0 %v290
    %308 = vmatprep.subr.bf16.mxu0 0
    %309 = vmatpush1.bf16.msra.mxu0 %v291
    %310 = vmatprep.subr.bf16.mxu0 0
    %311 = vmatpush1.bf16.msra.mxu0 %v292
    %312 = vmatprep.subr.bf16.mxu0 0
    %313 = vmatpush1.bf16.msra.mxu0 %v293
    %314 = vmatprep.subr.bf16.mxu0 0
    %315 = vmatpush1.bf16.msra.mxu0 %v294
    %316 = vmatprep.subr.bf16.mxu0 0
    %317 = vmatpush1.bf16.msra.mxu0 %v295
    %318 = vmatprep.subr.bf16.mxu0 0
    %319 = vmatpush1.bf16.msra.mxu0 %v296
    %320 = vmatprep.subr.bf16.mxu0 0
    %321 = vmatpush1.bf16.msra.mxu0 %v297
    %322 = vmatprep.subr.bf16.mxu0 0
    %323 = vmatpush1.bf16.msra.mxu0 0
    %324 = vmatprep.subr.bf16.mxu0 0
    %325 = vmatpush1.bf16.msra.mxu0 0
    %326 = vmatprep.subr.bf16.mxu0 0
    %327 = vmatpush1.bf16.msra.mxu0 0
    %328 = vmatprep.subr.bf16.mxu0 0
    %329 = vmatpush1.bf16.msra.mxu0 0
    %330 = vmatprep.subr.bf16.mxu0 0
    %331 = vmatpush1.bf16.msra.mxu0 0
    %332 = vmatprep.subr.bf16.mxu0 0
    %333 = vmatpush1.bf16.msra.mxu0 0
    %334 = vmatprep.subr.bf16.mxu0 0
    %335 = vmatpush1.bf16.msra.mxu0 0
    %336 = vmatprep.subr.bf16.mxu0 0
    %337 = vmatpush1.bf16.msra.mxu0 0
    %338 = vmatprep.mubr.bf16.mxu0 0
    %339 = vmatmul.mubr.bf16.gmra.mrb[0].mxu0 %v234
    %v340 = vpop.f32.mrb[0].mxu0
    %v341 = vadd.f32 %v256, %v340
    %v342 = vpop.f32.mrb[0].mxu0
    %v343 = vpop.f32.mrb[0].mxu0
    %v344 = vadd.f32 %v256, %v343
    %v345 = vpop.f32.mrb[0].mxu0
    %346 = vdwg.mxu0
    %347 = vmax.xlane.f32.xlu0 %v341
    %v348 = vpop.xlane.xlu0 %347
    %349 = vmax.xlane.f32.xlu0 %v344
    %v350 = vpop.xlane.xlu0 %349
    %v351 = vsub.f32 %v341, %v348
    %v352 = vsub.f32 %v344, %v350
    %v353 = vmul.f32 %v351, 1.442695
    %v354 = vpow.pop %v353
    %v355 = vmul.f32 %v352, 1.442695
    %v356 = vpow.pop %v355
    %357 = vadd.xlane.f32.xlu0 %v354
    %v358 = vpop.xlane.xlu0 %357
    %359 = vadd.xlane.f32.xlu0 %v356
    %v360 = vpop.xlane.xlu0 %359
    %v361 = vrcp.pop %v358
    %v362 = vrcp.pop %v360
    %v363 = vmul.f32 %v354, %v361
    %v364 = vmul.f32 %v356, %v362
    %v365 = vpack.c.bf16 %v364, %v363
    %v366 = vmul.bf16 %v234, %v365
    %v367 = vld [vmem:[#allocation11] sm:$0xf]
    %v368 = vld [vmem:[#allocation11 + $0x4] sm:$0xf]
    %v369 = vld [vmem:[#allocation11 + $0x8] sm:$0xf]
    %v370 = vld [vmem:[#allocation11 + $0xc] sm:$0xf]
    %v371 = vld [vmem:[#allocation11 + $0x10] sm:$0xf]
    %v372 = vld [vmem:[#allocation11 + $0x14] sm:$0xf]
    %v373 = vld [vmem:[#allocation11 + $0x18] sm:$0xf]
    %v374 = vld [vmem:[#allocation11 + $0x1c] sm:$0xf]
    %v375 = vld [vmem:[#allocation11 + $0x20] sm:$0xf]
    %v376 = vld [vmem:[#allocation11 + $0x24] sm:$0xf]
    %v377 = vld [vmem:[#allocation11 + $0x28] sm:$0xf]
    %v378 = vld [vmem:[#allocation11 + $0x2c] sm:$0xf]
    %v379 = vld [vmem:[#allocation11 + $0x30] sm:$0xf]
    %v380 = vld [vmem:[#allocation11 + $0x34] sm:$0xf]
    %v381 = vld [vmem:[#allocation11 + $0x38] sm:$0xf]
    %v382 = vld [vmem:[#allocation11 + $0x3c] sm:$0xf]
    %v383 = vld [vmem:[#allocation13] sm:$0x1]
    %v385 = vlaneseq
    %v386 = vshrl.u32 %v385, 7
    %v387 = vsub.s32 0, %v386
    %v388 = vrot.slane %v383, %v387
    %v406 = vunpack.c.l.b16 %v367
    %v407 = vunpack.c.l.b16 %v368
    %v408 = vunpack.c.l.b16 %v369
    %v409 = vunpack.c.l.b16 %v370
    %v410 = vunpack.c.l.b16 %v371
    %v411 = vunpack.c.l.b16 %v372
    %v412 = vunpack.c.l.b16 %v373
    %v413 = vunpack.c.l.b16 %v374
    %v414 = vunpack.c.l.b16 %v375
    %v415 = vunpack.c.l.b16 %v376
    %v416 = vunpack.c.l.b16 %v377
    %v417 = vunpack.c.l.b16 %v378
    %v418 = vunpack.c.l.b16 %v379
    %v419 = vunpack.c.l.b16 %v380
    %v420 = vunpack.c.l.b16 %v381
    %v421 = vunpack.c.l.b16 %v382
    %v422 = vpack.c.b16 %v407, %v406
    %v423 = vpack.c.b16 %v409, %v408
    %v424 = vpack.c.b16 %v411, %v410
    %v425 = vpack.c.b16 %v413, %v412
    %v426 = vpack.c.b16 %v415, %v414
    %v427 = vpack.c.b16 %v417, %v416
    %v428 = vpack.c.b16 %v419, %v418
    %v429 = vpack.c.b16 %v421, %v420
    %438 = vmatprep.subr.bf16.mxu0 0
    %439 = vmatpush1.bf16.msra.mxu0 %v422
    %440 = vmatprep.subr.bf16.mxu0 0
    %441 = vmatpush1.bf16.msra.mxu0 %v423
    %442 = vmatprep.subr.bf16.mxu0 0
    %443 = vmatpush1.bf16.msra.mxu0 %v424
    %444 = vmatprep.subr.bf16.mxu0 0
    %445 = vmatpush1.bf16.msra.mxu0 %v425
    %446 = vmatprep.subr.bf16.mxu0 0
    %447 = vmatpush1.bf16.msra.mxu0 %v426
    %448 = vmatprep.subr.bf16.mxu0 0
    %449 = vmatpush1.bf16.msra.mxu0 %v427
    %450 = vmatprep.subr.bf16.mxu0 0
    %451 = vmatpush1.bf16.msra.mxu0 %v428
    %452 = vmatprep.subr.bf16.mxu0 0
    %453 = vmatpush1.bf16.msra.mxu0 %v429
    %454 = vmatprep.subr.bf16.mxu0 0
    %455 = vmatpush1.bf16.msra.mxu0 0
    %456 = vmatprep.subr.bf16.mxu0 0
    %457 = vmatpush1.bf16.msra.mxu0 0
    %458 = vmatprep.subr.bf16.mxu0 0
    %459 = vmatpush1.bf16.msra.mxu0 0
    %460 = vmatprep.subr.bf16.mxu0 0
    %461 = vmatpush1.bf16.msra.mxu0 0
    %462 = vmatprep.subr.bf16.mxu0 0
    %463 = vmatpush1.bf16.msra.mxu0 0
    %464 = vmatprep.subr.bf16.mxu0 0
    %465 = vmatpush1.bf16.msra.mxu0 0
    %466 = vmatprep.subr.bf16.mxu0 0
    %467 = vmatpush1.bf16.msra.mxu0 0
    %468 = vmatprep.subr.bf16.mxu0 0
    %469 = vmatpush1.bf16.msra.mxu0 0
    %470 = vmatprep.mubr.bf16.mxu0 0
    %471 = vmatmul.mubr.bf16.gmra.mrb[0].mxu0 %v366
    %v472 = vpop.f32.mrb[0].mxu0
    %v473 = vadd.f32 %v388, %v472
    %v474 = vpop.f32.mrb[0].mxu0
    %v475 = vpop.f32.mrb[0].mxu0
    %v476 = vadd.f32 %v388, %v475
    %v477 = vpop.f32.mrb[0].mxu0
    %478 = vdwg.mxu0
    %479 = vst [vmem:[#allocation14] sm:$0xff] %v473
    %480 = vst [vmem:[#allocation14 + $0x8] sm:$0xff] %v476
    // Predicated region
    $region58: #{tpu_custom_call.1} parent=1 // pred_check
      _
    $region59: #{tpu_custom_call.1} parent=1 // pred_check_branch
      %482 = sbr.rel (0) target = $region61
    $region60: #{tpu_custom_call.1} parent=1 // pred_region
      %s484 = ssub.s32 256, 256
      %485 = vsyncadd [#allocation4], %s484
      %s486 = sshll.u32 [#allocation14], 4
      %s487 = int_to_ptr.vmem [resolvable:$true] %s486
      %492 = dma.vmem_to_hbm [thread:$0]  %s487, 256, %s7, [#allocation4], 128, 128, 8
    $region61: #{tpu_custom_call.1} parent=1 // pred_fallthru
      _
    // Predicated region
    $region62: #{tpu_custom_call.1} parent=1 // pred_check
      _
    $region63: #{tpu_custom_call.1} parent=1 // pred_check_branch
      %494 = sbr.rel (0) target = $region65
    $region64: #{tpu_custom_call.1} parent=1 // pred_region
      %495 = dma.done [#allocation4], 256
    $region65: #{tpu_custom_call.1} parent=1 // pred_fallthru
      _
    %496 = vsyncpa [#allocation3], 1
    %497 = vsyncpa [#allocation6], 1
    %498 = vsyncpa [#allocation9], 1
    %499 = vsyncpa [#allocation12], 1
    %500 = vsyncpa [#allocation4], 1

</llo_original>
